<compile_context>
chip_gen: v5e
topology: v5e:2x2
jax: 0.10.0
libtpu: 0.0.40
codegen_flags: <defaults>
</compile_context>

<pallas_src>
import jax
import jax.numpy as jnp
from jax.experimental import pallas as pl
from jax.experimental.pallas import tpu as pltpu

HIDDEN_SIZE = 16
EPS = 1e-6
TILE_ROWS128 = 4096  # 128-lane rows per block -> 2 MiB per f32 buffer


def _round_up(x: int, m: int) -> int:
    return ((x + m - 1) // m) * m


def _rmsnorm_kernel(x_ref, w_ref, bd_ref, o_ref):
    # x_ref : (tile, 128) f32  -- 128//hidden logical rows packed per lane row
    # w_ref : (1, 128)    f32  -- weight tiled across lane groups (resident)
    # bd_ref: (128, 128)  f32  -- block-diagonal 1/hidden matrix (resident)
    x = x_ref[...]
    # Per-lane-group mean of x^2, broadcast to every lane of its group.
    # MXU is idle otherwise -> free slot; HIGHEST precision ~ f32-exact sum.
    var = jnp.dot(
        x * x,
        bd_ref[...],
        precision=jax.lax.Precision.HIGHEST,
        preferred_element_type=jnp.float32,
    )
    inv = jax.lax.rsqrt(var + EPS)          # EUP slot (free vs. HBM DMA)
    o_ref[...] = (x * inv) * w_ref[...]     # lane-dense VPU ops


def rmsnorm(hidden_states: jnp.ndarray, weight_fp16: jnp.ndarray) -> jnp.ndarray:
    """hidden_states: [..., hidden] float32; weight_fp16: [hidden] float16."""
    orig_shape = hidden_states.shape
    hidden = orig_shape[-1]
    assert 128 % hidden == 0, "hidden must divide 128 for the packed-lane layout"
    groups = 128 // hidden

    total = hidden_states.size
    flat = hidden_states.reshape(-1)               # free contiguous view
    padded_total = _round_up(total, 128)
    if padded_total != total:
        # Rare fallback: only when batch*seq is not a multiple of 128/hidden.
        flat = jnp.pad(flat, (0, padded_total - total))
    x2d = flat.reshape(padded_total // 128, 128)   # free contiguous view
    R = x2d.shape[0]

    # Tile selection: 1-4 MiB blocks, keep >= 2 grid steps so v7x's two TCs
    # both get work on the (only) "parallel" axis.  The last block may be
    # ragged -- Pallas masks the out-of-bounds store, and garbage rows never
    # contaminate valid rows (the matmul reduces over lanes, not rows).
    if R > 8:
        tile = min(TILE_ROWS128, _round_up(pl.cdiv(R, 2), 8))
    else:
        tile = R                                   # tiny input: one full block
    grid = pl.cdiv(R, tile)

    # fp16 weight promoted to f32 once, lane-tiled -> plain VPU broadcast.
    w_row = jnp.tile(weight_fp16.astype(jnp.float32), groups).reshape(1, 128)

    # 128x128 block-diagonal 1/hidden matrix: group-mean via one MXU matmul.
    lane_group = jnp.arange(128, dtype=jnp.int32) // hidden
    bd = jnp.where(
        lane_group[:, None] == lane_group[None, :],
        jnp.float32(1.0 / hidden),
        jnp.float32(0.0),
    )

    out2d = pl.pallas_call(
        _rmsnorm_kernel,
        out_shape=jax.ShapeDtypeStruct((R, 128), jnp.float32),
        grid_spec=pl.GridSpec(
            grid=(grid,),
            in_specs=[
                pl.BlockSpec((tile, 128), lambda i: (i, 0)),
                pl.BlockSpec((1, 128), lambda i: (0, 0)),     # resident weight
                pl.BlockSpec((128, 128), lambda i: (0, 0)),   # resident blockdiag
            ],
            out_specs=pl.BlockSpec((tile, 128), lambda i: (i, 0)),
        ),
        compiler_params=pltpu.CompilerParams(
            dimension_semantics=("parallel",),
            vmem_limit_bytes=32 * 1024 * 1024,  # 4 x 2 MiB buffers + residents
        ),
    )(x2d, w_row, bd)

    out = out2d.reshape(-1)
    if padded_total != total:
        out = out[:total]
    return out.reshape(orig_shape)


if __name__ == "__main__":
    key = jax.random.PRNGKey(0)
    batch, seq, hidden = 2, 8, HIDDEN_SIZE
    x = jax.random.normal(key, (batch, seq, hidden), dtype=jnp.float32)

    # Parameter init matching nn.Parameter(torch.ones(hidden, dtype=float16)).
    weight = jnp.ones((hidden,), dtype=jnp.float16)

    y = rmsnorm(x, weight)
    jax.block_until_ready(y)

    # Reference (same semantics as the PyTorch module: fp16 weight promotes to f32).
    var = jnp.mean(x * x, axis=-1, keepdims=True)
    ref = weight.astype(jnp.float32) * (x * jax.lax.rsqrt(var + EPS))
    assert y.shape == (batch, seq, hidden)
    assert y.dtype == jnp.float32
    assert jnp.allclose(y, ref, atol=1e-5, rtol=1e-5)

    # Non-uniform fp16 weight: verifies the lane-tiled weight layout.
    w2 = (jnp.arange(hidden, dtype=jnp.float32) * 0.125 - 0.5).astype(jnp.float16)
    y2 = rmsnorm(x, w2)
    jax.block_until_ready(y2)
    ref2 = w2.astype(jnp.float32) * (x * jax.lax.rsqrt(var + EPS))
    assert jnp.allclose(y2, ref2, atol=1e-5, rtol=1e-5)

    # Exercise the multi-tile (grid > 1) path as well.
    x_big = jax.random.normal(jax.random.PRNGKey(1), (4, 1024, hidden),
                              dtype=jnp.float32)
    y_big = rmsnorm(x_big, weight)
    jax.block_until_ready(y_big)
    var_b = jnp.mean(x_big * x_big, axis=-1, keepdims=True)
    ref_b = weight.astype(jnp.float32) * (x_big * jax.lax.rsqrt(var_b + EPS))
    assert jnp.allclose(y_big, ref_b, atol=1e-5, rtol=1e-5)

    print("KERNEL_OK")
</pallas_src>

<mosaic_0001>
module attributes {stable_mosaic.version = 11 : i64} {
  func.func @_rmsnorm_kernel(%arg0: i32, %arg1: memref<2x128xf32, #tpu.memory_space<vmem>>, %arg2: memref<1x128xf32, #tpu.memory_space<vmem>>, %arg3: memref<128x128xf32, #tpu.memory_space<vmem>>, %arg4: memref<2x128xf32, #tpu.memory_space<vmem>>) attributes {dimension_semantics = [#tpu.dimension_semantics<parallel>], iteration_bounds = array<i64: 1>, scalar_prefetch = 0 : i64, scratch_operands = 0 : i64, tpu.core_type = #tpu.core_type<tc>, window_params = [{transform_indices = @transform_0, window_bounds = array<i64: 2, 128>}, {pipeline_mode = #tpu.pipeline_mode<synchronous>, transform_indices = @transform_1, window_bounds = array<i64: 1, 128>}, {pipeline_mode = #tpu.pipeline_mode<synchronous>, transform_indices = @transform_2, window_bounds = array<i64: 128, 128>}, {transform_indices = @transform_3, window_bounds = array<i64: 2, 128>}]} {
    %c0 = arith.constant 0 : index
    %c0_0 = arith.constant 0 : index
    %0 = vector.load %arg1[%c0, %c0_0] : memref<2x128xf32, #tpu.memory_space<vmem>>, vector<2x128xf32>
    %1 = arith.mulf %0, %0 : vector<2x128xf32>
    %c0_1 = arith.constant 0 : index
    %c0_2 = arith.constant 0 : index
    %2 = vector.load %arg3[%c0_1, %c0_2] : memref<128x128xf32, #tpu.memory_space<vmem>>, vector<128x128xf32>
    %cst = arith.constant dense<0.000000e+00> : vector<2x128xf32>
    %3 = tpu.matmul %1, %2, %cst {dimension_numbers = #tpu.dot_dimension_numbers<[1], [0], [0], [1], [0, 0, 1, 1], [], []>, precision = #tpu.contract_precision<fp32>} : vector<2x128xf32>, vector<128x128xf32>, vector<2x128xf32> -> vector<2x128xf32>
    %cst_3 = arith.constant 9.99999997E-7 : f32
    %4 = vector.broadcast %cst_3 : f32 to vector<2x128xf32>
    %5 = arith.addf %3, %4 : vector<2x128xf32>
    %6 = math.rsqrt %5 : vector<2x128xf32>
    %7 = arith.mulf %0, %6 : vector<2x128xf32>
    %c0_4 = arith.constant 0 : index
    %c0_5 = arith.constant 0 : index
    %8 = vector.load %arg2[%c0_4, %c0_5] : memref<1x128xf32, #tpu.memory_space<vmem>>, vector<1x128xf32>
    %9 = vector.broadcast %8 : vector<1x128xf32> to vector<2x128xf32>
    %10 = arith.mulf %7, %9 : vector<2x128xf32>
    %c0_6 = arith.constant 0 : index
    %c0_7 = arith.constant 0 : index
    %11 = vector.load %arg4[%c0_6, %c0_7] : memref<2x128xf32, #tpu.memory_space<vmem>>, vector<2x128xf32>
    tpu.vector_store %arg4[%c0_6, %c0_7], %10 {strides = array<i32>} : memref<2x128xf32, #tpu.memory_space<vmem>>, vector<2x128xf32>,
    return
  }
  func.func @transform_0(%arg0: i32) -> (i32, i32) {
    %c0_i32 = arith.constant 0 : i32
    %c0_i32_0 = arith.constant 0 : i32
    return %arg0, %c0_i32 : i32, i32
  }
  func.func @transform_1(%arg0: i32) -> (i32, i32) {
    %c0_i32 = arith.constant 0 : i32
    %c0_i32_0 = arith.constant 0 : i32
    %c0_i32_1 = arith.constant 0 : i32
    return %c0_i32, %c0_i32_0 : i32, i32
  }
  func.func @transform_2(%arg0: i32) -> (i32, i32) {
    %c0_i32 = arith.constant 0 : i32
    %c0_i32_0 = arith.constant 0 : i32
    %c0_i32_1 = arith.constant 0 : i32
    return %c0_i32, %c0_i32_0 : i32, i32
  }
  func.func @transform_3(%arg0: i32) -> (i32, i32) {
    %c0_i32 = arith.constant 0 : i32
    %c0_i32_0 = arith.constant 0 : i32
    return %arg0, %c0_i32 : i32, i32
  }
}

</mosaic_0001>

<llo_original>
// kernel: tpu_custom_call.1
$region0: #{tpu_custom_call.1}
  #allocation0 [shape = 'u32[]', space=smem, size = 0x4, offset = 0x4, fixed_abs, tag = 'smem constant byte address 0x4 - core index']
  #allocation1 [shape = 'u32[72,128]{1,0:T(1,128)}', space=vmem, size = 0x9000, scoped, tag = 'internal scratch']
  %s0 = inlined_call_operand.hbm [shape: f32[2,128], index: 0, kind: input, shape index: {}]
  %s1 = inlined_call_operand.hbm [shape: f32[1,128], index: 1, kind: input, shape index: {}]
  %s2 = inlined_call_operand.hbm [shape: f32[128,128], index: 2, kind: input, shape index: {}]
  %s3 = inlined_call_operand.hbm [shape: f32[2,128], index: 3, kind: output, shape index: {}]
  %s4 = sld [smem:[#allocation0]]
  $region34: #{tpu_custom_call.1} parent=0
    _
  %s6 = ssub.s32 1, %s4
  %s7 = scalar_select 0, %s6, %s4
  $region1: #{tpu_custom_call.1} parent=0
    #allocation2 [shape = 'u8[1024]{0}', space=vmem, size = 0x400, scoped, tag = 'input window, operand 0, single buffered']
    #allocation3 [shape = 's32[1]{0}', space=sflag, size = 0x4, scoped, tag = 'scoped memory for tpu_custom_call.1']
    #allocation4 [shape = 's32[1]{0}', space=sflag, size = 0x4, scoped, tag = 'scoped memory for tpu_custom_call.1']
    #allocation5 [shape = 'u8[512]{0}', space=vmem, size = 0x400, scoped, tag = 'input window, operand 1, single buffered']
    #allocation6 [shape = 's32[1]{0}', space=sflag, size = 0x4, scoped, tag = 'scoped memory for tpu_custom_call.1']
    #allocation7 [shape = 'u8[65536]{0}', space=vmem, size = 0x10000, scoped, tag = 'input window, operand 2, single buffered']
    #allocation8 [shape = 'u8[1024]{0}', space=vmem, size = 0x400, scoped, tag = 'output window, operand 0, single buffered']
    %8 = vsyncpa [#allocation3], 0
    %9 = vsyncpa [#allocation6], 0
    %10 = vsyncpa [#allocation4], 0
    // Predicated region
    $region2: #{tpu_custom_call.1} parent=1 // pred_check
      _
    $region3: #{tpu_custom_call.1} parent=1 // pred_check_branch
      %12 = sbr.rel (0) target = $region5
    $region4: #{tpu_custom_call.1} parent=1 // pred_region
      %14 = vsyncadd [#allocation3], 0
      %s16 = sshll.u32 %s0, 4
      %s17 = int_to_ptr.hbm [resolvable:$true] %s16
      %s18 = sshll.u32 [#allocation2], 4
      %s19 = int_to_ptr.vmem [resolvable:$true] %s18
      %21 = dma.hbm_to_vmem [thread:$0]  %s17, 32, %s19, [#allocation3]
    $region5: #{tpu_custom_call.1} parent=1 // pred_fallthru
      _
    // Predicated region
    $region6: #{tpu_custom_call.1} parent=1 // pred_check
      _
    $region7: #{tpu_custom_call.1} parent=1 // pred_check_branch
      %23 = sbr.rel (0) target = $region9
    $region8: #{tpu_custom_call.1} parent=1 // pred_region
      %25 = vsyncadd [#allocation6], 0
      %s27 = sshll.u32 %s1, 4
      %s28 = int_to_ptr.hbm [resolvable:$true] %s27
      %s29 = sshll.u32 [#allocation5], 4
      %s30 = int_to_ptr.vmem [resolvable:$true] %s29
      %32 = dma.hbm_to_vmem [thread:$0]  %s28, 16, %s30, [#allocation6]
    $region9: #{tpu_custom_call.1} parent=1 // pred_fallthru
      _
    // Predicated region
    $region10: #{tpu_custom_call.1} parent=1 // pred_check
      _
    $region11: #{tpu_custom_call.1} parent=1 // pred_check_branch
      %34 = sbr.rel (0) target = $region13
    $region12: #{tpu_custom_call.1} parent=1 // pred_region
      %36 = vsyncadd [#allocation6], 0
      %s37 = sshll.u32 %s2, 4
      %s38 = int_to_ptr.hbm [resolvable:$true] %s37
      %s39 = sshll.u32 [#allocation7], 4
      %s40 = int_to_ptr.vmem [resolvable:$true] %s39
      %45 = dma.hbm_to_vmem [thread:$0]  %s38, 2048, %s40, [#allocation6], 128, 128, 8
    $region13: #{tpu_custom_call.1} parent=1 // pred_fallthru
      _
    // Predicated region
    $region14: #{tpu_custom_call.1} parent=1 // pred_check
      _
    $region15: #{tpu_custom_call.1} parent=1 // pred_check_branch
      %47 = sbr.rel (0) target = $region17
    $region16: #{tpu_custom_call.1} parent=1 // pred_region
      %49 = dma.done [#allocation3], 32
    $region17: #{tpu_custom_call.1} parent=1 // pred_fallthru
      _
    // Predicated region
    $region18: #{tpu_custom_call.1} parent=1 // pred_check
      _
    $region19: #{tpu_custom_call.1} parent=1 // pred_check_branch
      %51 = sbr.rel (0) target = $region21
    $region20: #{tpu_custom_call.1} parent=1 // pred_region
      %53 = dma.done [#allocation6], 16
    $region21: #{tpu_custom_call.1} parent=1 // pred_fallthru
      _
    // Predicated region
    $region22: #{tpu_custom_call.1} parent=1 // pred_check
      _
    $region23: #{tpu_custom_call.1} parent=1 // pred_check_branch
      %55 = sbr.rel (0) target = $region25
    $region24: #{tpu_custom_call.1} parent=1 // pred_region
      %57 = dma.done [#allocation6], 2048
    $region25: #{tpu_custom_call.1} parent=1 // pred_fallthru
      _
    %v58 = vld [vmem:[#allocation2] sm:$0x3]
    %v59 = vmul.f32 %v58, %v58
    %v60 = vld [vmem:[#allocation7] sm:$0xff]
    %v61 = vld [vmem:[#allocation7 + $0x8] sm:$0xff]
    %v62 = vld [vmem:[#allocation7 + $0x10] sm:$0xff]
    %v63 = vld [vmem:[#allocation7 + $0x18] sm:$0xff]
    %v64 = vld [vmem:[#allocation7 + $0x20] sm:$0xff]
    %v65 = vld [vmem:[#allocation7 + $0x28] sm:$0xff]
    %v66 = vld [vmem:[#allocation7 + $0x30] sm:$0xff]
    %v67 = vld [vmem:[#allocation7 + $0x38] sm:$0xff]
    %v68 = vld [vmem:[#allocation7 + $0x40] sm:$0xff]
    %v69 = vld [vmem:[#allocation7 + $0x48] sm:$0xff]
    %v70 = vld [vmem:[#allocation7 + $0x50] sm:$0xff]
    %v71 = vld [vmem:[#allocation7 + $0x58] sm:$0xff]
    %v72 = vld [vmem:[#allocation7 + $0x60] sm:$0xff]
    %v73 = vld [vmem:[#allocation7 + $0x68] sm:$0xff]
    %v74 = vld [vmem:[#allocation7 + $0x70] sm:$0xff]
    %v75 = vld [vmem:[#allocation7 + $0x78] sm:$0xff]
    %v76 = vand.u32 %v75, 4294901760
    %77 = vmatpush.msra.mxu0 %v76
    %v78 = vand.u32 %v74, 4294901760
    %79 = vmatpush.msra.mxu0 %v78
    %v80 = vand.u32 %v73, 4294901760
    %81 = vmatpush.msra.mxu0 %v80
    %v82 = vand.u32 %v72, 4294901760
    %83 = vmatpush.msra.mxu0 %v82
    %v84 = vand.u32 %v71, 4294901760
    %85 = vmatpush.msra.mxu0 %v84
    %v86 = vand.u32 %v70, 4294901760
    %87 = vmatpush.msra.mxu0 %v86
    %v88 = vand.u32 %v69, 4294901760
    %89 = vmatpush.msra.mxu0 %v88
    %v90 = vand.u32 %v68, 4294901760
    %91 = vmatpush.msra.mxu0 %v90
    %v92 = vand.u32 %v67, 4294901760
    %93 = vmatpush.msra.mxu0 %v92
    %v94 = vand.u32 %v66, 4294901760
    %95 = vmatpush.msra.mxu0 %v94
    %v96 = vand.u32 %v65, 4294901760
    %97 = vmatpush.msra.mxu0 %v96
    %v98 = vand.u32 %v64, 4294901760
    %99 = vmatpush.msra.mxu0 %v98
    %v100 = vand.u32 %v63, 4294901760
    %101 = vmatpush.msra.mxu0 %v100
    %v102 = vand.u32 %v62, 4294901760
    %103 = vmatpush.msra.mxu0 %v102
    %v104 = vand.u32 %v61, 4294901760
    %105 = vmatpush.msra.mxu0 %v104
    %v106 = vand.u32 %v60, 4294901760
    %107 = vmatpush.msra.mxu0 %v106
    %v108 = vand.u32 %v59, 4294901760
    %v109 = vsub.f32 %v59, %v108
    %v110 = vand.u32 %v109, 4294901760
    %v111 = vsub.f32 %v109, %v110
    %v112 = vand.u32 %v111, 4294901760
    %113 = vmatmul.f32.gmra.mxu0 %v112
    %v114 = vpop.f32.mrf.mxu0
    %v115 = vadd.f32 1e-06, %v114
    %116 = vdwg.mxu0
    %v117 = vand.u32 %v75, 4294901760
    %v118 = vsub.f32 %v75, %v117
    %v119 = vand.u32 %v118, 4294901760
    %v120 = vsub.f32 %v118, %v119
    %v121 = vand.u32 %v120, 4294901760
    %122 = vmatpush.msra.mxu0 %v121
    %v123 = vand.u32 %v74, 4294901760
    %v124 = vsub.f32 %v74, %v123
    %v125 = vand.u32 %v124, 4294901760
    %v126 = vsub.f32 %v124, %v125
    %v127 = vand.u32 %v126, 4294901760
    %128 = vmatpush.msra.mxu0 %v127
    %v129 = vand.u32 %v73, 4294901760
    %v130 = vsub.f32 %v73, %v129
    %v131 = vand.u32 %v130, 4294901760
    %v132 = vsub.f32 %v130, %v131
    %v133 = vand.u32 %v132, 4294901760
    %134 = vmatpush.msra.mxu0 %v133
    %v135 = vand.u32 %v72, 4294901760
    %v136 = vsub.f32 %v72, %v135
    %v137 = vand.u32 %v136, 4294901760
    %v138 = vsub.f32 %v136, %v137
    %v139 = vand.u32 %v138, 4294901760
    %140 = vmatpush.msra.mxu0 %v139
    %v141 = vand.u32 %v71, 4294901760
    %v142 = vsub.f32 %v71, %v141
    %v143 = vand.u32 %v142, 4294901760
    %v144 = vsub.f32 %v142, %v143
    %v145 = vand.u32 %v144, 4294901760
    %146 = vmatpush.msra.mxu0 %v145
    %v147 = vand.u32 %v70, 4294901760
    %v148 = vsub.f32 %v70, %v147
    %v149 = vand.u32 %v148, 4294901760
    %v150 = vsub.f32 %v148, %v149
    %v151 = vand.u32 %v150, 4294901760
    %152 = vmatpush.msra.mxu0 %v151
    %v153 = vand.u32 %v69, 4294901760
    %v154 = vsub.f32 %v69, %v153
    %v155 = vand.u32 %v154, 4294901760
    %v156 = vsub.f32 %v154, %v155
    %v157 = vand.u32 %v156, 4294901760
    %158 = vmatpush.msra.mxu0 %v157
    %v159 = vand.u32 %v68, 4294901760
    %v160 = vsub.f32 %v68, %v159
    %v161 = vand.u32 %v160, 4294901760
    %v162 = vsub.f32 %v160, %v161
    %v163 = vand.u32 %v162, 4294901760
    %164 = vmatpush.msra.mxu0 %v163
    %v165 = vand.u32 %v67, 4294901760
    %v166 = vsub.f32 %v67, %v165
    %v167 = vand.u32 %v166, 4294901760
    %v168 = vsub.f32 %v166, %v167
    %v169 = vand.u32 %v168, 4294901760
    %170 = vmatpush.msra.mxu0 %v169
    %v171 = vand.u32 %v66, 4294901760
    %v172 = vsub.f32 %v66, %v171
    %v173 = vand.u32 %v172, 4294901760
    %v174 = vsub.f32 %v172, %v173
    %v175 = vand.u32 %v174, 4294901760
    %176 = vmatpush.msra.mxu0 %v175
    %v177 = vand.u32 %v65, 4294901760
    %v178 = vsub.f32 %v65, %v177
    %v179 = vand.u32 %v178, 4294901760
    %v180 = vsub.f32 %v178, %v179
    %v181 = vand.u32 %v180, 4294901760
    %182 = vmatpush.msra.mxu0 %v181
    %v183 = vand.u32 %v64, 4294901760
    %v184 = vsub.f32 %v64, %v183
    %v185 = vand.u32 %v184, 4294901760
    %v186 = vsub.f32 %v184, %v185
    %v187 = vand.u32 %v186, 4294901760
    %188 = vmatpush.msra.mxu0 %v187
    %v189 = vand.u32 %v63, 4294901760
    %v190 = vsub.f32 %v63, %v189
    %v191 = vand.u32 %v190, 4294901760
    %v192 = vsub.f32 %v190, %v191
    %v193 = vand.u32 %v192, 4294901760
    %194 = vmatpush.msra.mxu0 %v193
    %v195 = vand.u32 %v62, 4294901760
    %v196 = vsub.f32 %v62, %v195
    %v197 = vand.u32 %v196, 4294901760
    %v198 = vsub.f32 %v196, %v197
    %v199 = vand.u32 %v198, 4294901760
    %200 = vmatpush.msra.mxu0 %v199
    %v201 = vand.u32 %v61, 4294901760
    %v202 = vsub.f32 %v61, %v201
    %v203 = vand.u32 %v202, 4294901760
    %v204 = vsub.f32 %v202, %v203
    %v205 = vand.u32 %v204, 4294901760
    %206 = vmatpush.msra.mxu0 %v205
    %v207 = vand.u32 %v60, 4294901760
    %v208 = vsub.f32 %v60, %v207
    %v209 = vand.u32 %v208, 4294901760
    %v210 = vsub.f32 %v208, %v209
    %v211 = vand.u32 %v210, 4294901760
    %212 = vmatpush.msra.mxu0 %v211
    %v213 = vand.u32 %v59, 4294901760
    %214 = vmatmul.f32.gmra.mxu0 %v213
    %v215 = vpop.f32.mrf.mxu0
    %v216 = vadd.f32 %v115, %v215
    %217 = vdwg.mxu0
    %v218 = vand.u32 %v75, 4294901760
    %v219 = vsub.f32 %v75, %v218
    %220 = vmatpush.msra.mxu0 %v219
    %v221 = vand.u32 %v74, 4294901760
    %v222 = vsub.f32 %v74, %v221
    %223 = vmatpush.msra.mxu0 %v222
    %v224 = vand.u32 %v73, 4294901760
    %v225 = vsub.f32 %v73, %v224
    %226 = vmatpush.msra.mxu0 %v225
    %v227 = vand.u32 %v72, 4294901760
    %v228 = vsub.f32 %v72, %v227
    %229 = vmatpush.msra.mxu0 %v228
    %v230 = vand.u32 %v71, 4294901760
    %v231 = vsub.f32 %v71, %v230
    %232 = vmatpush.msra.mxu0 %v231
    %v233 = vand.u32 %v70, 4294901760
    %v234 = vsub.f32 %v70, %v233
    %235 = vmatpush.msra.mxu0 %v234
    %v236 = vand.u32 %v69, 4294901760
    %v237 = vsub.f32 %v69, %v236
    %238 = vmatpush.msra.mxu0 %v237
    %v239 = vand.u32 %v68, 4294901760
    %v240 = vsub.f32 %v68, %v239
    %241 = vmatpush.msra.mxu0 %v240
    %v242 = vand.u32 %v67, 4294901760
    %v243 = vsub.f32 %v67, %v242
    %244 = vmatpush.msra.mxu0 %v243
    %v245 = vand.u32 %v66, 4294901760
    %v246 = vsub.f32 %v66, %v245
    %247 = vmatpush.msra.mxu0 %v246
    %v248 = vand.u32 %v65, 4294901760
    %v249 = vsub.f32 %v65, %v248
    %250 = vmatpush.msra.mxu0 %v249
    %v251 = vand.u32 %v64, 4294901760
    %v252 = vsub.f32 %v64, %v251
    %253 = vmatpush.msra.mxu0 %v252
    %v254 = vand.u32 %v63, 4294901760
    %v255 = vsub.f32 %v63, %v254
    %256 = vmatpush.msra.mxu0 %v255
    %v257 = vand.u32 %v62, 4294901760
    %v258 = vsub.f32 %v62, %v257
    %259 = vmatpush.msra.mxu0 %v258
    %v260 = vand.u32 %v61, 4294901760
    %v261 = vsub.f32 %v61, %v260
    %262 = vmatpush.msra.mxu0 %v261
    %v263 = vand.u32 %v60, 4294901760
    %v264 = vsub.f32 %v60, %v263
    %265 = vmatpush.msra.mxu0 %v264
    %v266 = vand.u32 %v59, 4294901760
    %v267 = vsub.f32 %v59, %v266
    %268 = vmatmul.f32.gmra.mxu0 %v267
    %v269 = vpop.f32.mrf.mxu0
    %v270 = vadd.f32 %v216, %v269
    %271 = vdwg.mxu0
    %v272 = vand.u32 %v75, 4294901760
    %273 = vmatpush.msra.mxu0 %v272
    %v274 = vand.u32 %v74, 4294901760
    %275 = vmatpush.msra.mxu0 %v274
    %v276 = vand.u32 %v73, 4294901760
    %277 = vmatpush.msra.mxu0 %v276
    %v278 = vand.u32 %v72, 4294901760
    %279 = vmatpush.msra.mxu0 %v278
    %v280 = vand.u32 %v71, 4294901760
    %281 = vmatpush.msra.mxu0 %v280
    %v282 = vand.u32 %v70, 4294901760
    %283 = vmatpush.msra.mxu0 %v282
    %v284 = vand.u32 %v69, 4294901760
    %285 = vmatpush.msra.mxu0 %v284
    %v286 = vand.u32 %v68, 4294901760
    %287 = vmatpush.msra.mxu0 %v286
    %v288 = vand.u32 %v67, 4294901760
    %289 = vmatpush.msra.mxu0 %v288
    %v290 = vand.u32 %v66, 4294901760
    %291 = vmatpush.msra.mxu0 %v290
    %v292 = vand.u32 %v65, 4294901760
    %293 = vmatpush.msra.mxu0 %v292
    %v294 = vand.u32 %v64, 4294901760
    %295 = vmatpush.msra.mxu0 %v294
    %v296 = vand.u32 %v63, 4294901760
    %297 = vmatpush.msra.mxu0 %v296
    %v298 = vand.u32 %v62, 4294901760
    %299 = vmatpush.msra.mxu0 %v298
    %v300 = vand.u32 %v61, 4294901760
    %301 = vmatpush.msra.mxu0 %v300
    %v302 = vand.u32 %v60, 4294901760
    %303 = vmatpush.msra.mxu0 %v302
    %v304 = vand.u32 %v59, 4294901760
    %v305 = vsub.f32 %v59, %v304
    %v306 = vand.u32 %v305, 4294901760
    %307 = vmatmul.f32.gmra.mxu0 %v306
    %v308 = vpop.f32.mrf.mxu0
    %v309 = vadd.f32 %v270, %v308
    %310 = vdwg.mxu0
    %v311 = vand.u32 %v75, 4294901760
    %v312 = vsub.f32 %v75, %v311
    %v313 = vand.u32 %v312, 4294901760
    %314 = vmatpush.msra.mxu0 %v313
    %v315 = vand.u32 %v74, 4294901760
    %v316 = vsub.f32 %v74, %v315
    %v317 = vand.u32 %v316, 4294901760
    %318 = vmatpush.msra.mxu0 %v317
    %v319 = vand.u32 %v73, 4294901760
    %v320 = vsub.f32 %v73, %v319
    %v321 = vand.u32 %v320, 4294901760
    %322 = vmatpush.msra.mxu0 %v321
    %v323 = vand.u32 %v72, 4294901760
    %v324 = vsub.f32 %v72, %v323
    %v325 = vand.u32 %v324, 4294901760
    %326 = vmatpush.msra.mxu0 %v325
    %v327 = vand.u32 %v71, 4294901760
    %v328 = vsub.f32 %v71, %v327
    %v329 = vand.u32 %v328, 4294901760
    %330 = vmatpush.msra.mxu0 %v329
    %v331 = vand.u32 %v70, 4294901760
    %v332 = vsub.f32 %v70, %v331
    %v333 = vand.u32 %v332, 4294901760
    %334 = vmatpush.msra.mxu0 %v333
    %v335 = vand.u32 %v69, 4294901760
    %v336 = vsub.f32 %v69, %v335
    %v337 = vand.u32 %v336, 4294901760
    %338 = vmatpush.msra.mxu0 %v337
    %v339 = vand.u32 %v68, 4294901760
    %v340 = vsub.f32 %v68, %v339
    %v341 = vand.u32 %v340, 4294901760
    %342 = vmatpush.msra.mxu0 %v341
    %v343 = vand.u32 %v67, 4294901760
    %v344 = vsub.f32 %v67, %v343
    %v345 = vand.u32 %v344, 4294901760
    %346 = vmatpush.msra.mxu0 %v345
    %v347 = vand.u32 %v66, 4294901760
    %v348 = vsub.f32 %v66, %v347
    %v349 = vand.u32 %v348, 4294901760
    %350 = vmatpush.msra.mxu0 %v349
    %v351 = vand.u32 %v65, 4294901760
    %v352 = vsub.f32 %v65, %v351
    %v353 = vand.u32 %v352, 4294901760
    %354 = vmatpush.msra.mxu0 %v353
    %v355 = vand.u32 %v64, 4294901760
    %v356 = vsub.f32 %v64, %v355
    %v357 = vand.u32 %v356, 4294901760
    %358 = vmatpush.msra.mxu0 %v357
    %v359 = vand.u32 %v63, 4294901760
    %v360 = vsub.f32 %v63, %v359
    %v361 = vand.u32 %v360, 4294901760
    %362 = vmatpush.msra.mxu0 %v361
    %v363 = vand.u32 %v62, 4294901760
    %v364 = vsub.f32 %v62, %v363
    %v365 = vand.u32 %v364, 4294901760
    %366 = vmatpush.msra.mxu0 %v365
    %v367 = vand.u32 %v61, 4294901760
    %v368 = vsub.f32 %v61, %v367
    %v369 = vand.u32 %v368, 4294901760
    %370 = vmatpush.msra.mxu0 %v369
    %v371 = vand.u32 %v60, 4294901760
    %v372 = vsub.f32 %v60, %v371
    %v373 = vand.u32 %v372, 4294901760
    %374 = vmatpush.msra.mxu0 %v373
    %v375 = vand.u32 %v59, 4294901760
    %376 = vmatmul.f32.gmra.mxu0 %v375
    %v377 = vpop.f32.mrf.mxu0
    %v378 = vadd.f32 %v309, %v377
    %379 = vdwg.mxu0
    %v380 = vand.u32 %v75, 4294901760
    %381 = vmatpush.msra.mxu0 %v380
    %v382 = vand.u32 %v74, 4294901760
    %383 = vmatpush.msra.mxu0 %v382
    %v384 = vand.u32 %v73, 4294901760
    %385 = vmatpush.msra.mxu0 %v384
    %v386 = vand.u32 %v72, 4294901760
    %387 = vmatpush.msra.mxu0 %v386
    %v388 = vand.u32 %v71, 4294901760
    %389 = vmatpush.msra.mxu0 %v388
    %v390 = vand.u32 %v70, 4294901760
    %391 = vmatpush.msra.mxu0 %v390
    %v392 = vand.u32 %v69, 4294901760
    %393 = vmatpush.msra.mxu0 %v392
    %v394 = vand.u32 %v68, 4294901760
    %395 = vmatpush.msra.mxu0 %v394
    %v396 = vand.u32 %v67, 4294901760
    %397 = vmatpush.msra.mxu0 %v396
    %v398 = vand.u32 %v66, 4294901760
    %399 = vmatpush.msra.mxu0 %v398
    %v400 = vand.u32 %v65, 4294901760
    %401 = vmatpush.msra.mxu0 %v400
    %v402 = vand.u32 %v64, 4294901760
    %403 = vmatpush.msra.mxu0 %v402
    %v404 = vand.u32 %v63, 4294901760
    %405 = vmatpush.msra.mxu0 %v404
    %v406 = vand.u32 %v62, 4294901760
    %407 = vmatpush.msra.mxu0 %v406
    %v408 = vand.u32 %v61, 4294901760
    %409 = vmatpush.msra.mxu0 %v408
    %v410 = vand.u32 %v60, 4294901760
    %411 = vmatpush.msra.mxu0 %v410
    %v412 = vand.u32 %v59, 4294901760
    %413 = vmatmul.f32.gmra.mxu0 %v412
    %v414 = vpop.f32.mrf.mxu0
    %v415 = vadd.f32 %v378, %v414
    %416 = vdwg.mxu0
    %v417 = vrsqrt.pop %v415
    %v418 = vmul.f32 %v417, %v415
    %v419 = vmul.f32 %v418, %v417
    %v420 = vmul.f32 0.5, %v419
    %v421 = vsub.f32 1.5, %v420
    %v422 = vmul.f32 %v417, %v421
    %vm423 = vweird.f32 %v415
    %vm424 = vweird.f32 %v417
    %vm425 = vmor %vm423, %vm424
    %v426 = vsel %vm425, %v417, %v422
    %v427 = vmul.f32 %v58, %v426
    %v428 = vld [vmem:[#allocation5] sm:$0x1]
    %v430 = vperm.slane %v428, 0
    %v432 = vmul.f32 %v427, %v430
    %433 = vst [vmem:[#allocation8] sm:$0x3] %v432
    // Predicated region
    $region26: #{tpu_custom_call.1} parent=1 // pred_check
      _
    $region27: #{tpu_custom_call.1} parent=1 // pred_check_branch
      %435 = sbr.rel (0) target = $region29
    $region28: #{tpu_custom_call.1} parent=1 // pred_region
      %437 = vsyncadd [#allocation4], 0
      %s439 = sshll.u32 [#allocation8], 4
      %s440 = int_to_ptr.vmem [resolvable:$true] %s439
      %s441 = sshll.u32 %s3, 4
      %s442 = int_to_ptr.hbm [resolvable:$true] %s441
      %444 = dma.vmem_to_hbm [thread:$0]  %s440, 32, %s442, [#allocation4]
    $region29: #{tpu_custom_call.1} parent=1 // pred_fallthru
      _
    // Predicated region
    $region30: #{tpu_custom_call.1} parent=1 // pred_check
      _
    $region31: #{tpu_custom_call.1} parent=1 // pred_check_branch
      %446 = sbr.rel (0) target = $region33
    $region32: #{tpu_custom_call.1} parent=1 // pred_region
      %448 = dma.done [#allocation4], 32
    $region33: #{tpu_custom_call.1} parent=1 // pred_fallthru
      _
    %449 = vsyncpa [#allocation3], 1
    %450 = vsyncpa [#allocation6], 1
    %451 = vsyncpa [#allocation4], 1

</llo_original>
